<compile_context>
chip_gen: v7x
topology: tpu7x:2x2x1
jax: 0.10.0
libtpu: 0.0.40
codegen_flags: <defaults>
</compile_context>

<pallas_src>
import functools

import jax
import jax.numpy as jnp
from jax import lax
from jax.experimental import pallas as pl
from jax.experimental.pallas import tpu as pltpu

LN_EPS = 1e-5  # torch.nn.LayerNorm default


# --------------------------------------------------------------- utilities
def _round_up(x, m):
    return ((x + m - 1) // m) * m


def _vmem_budget_bytes():
    """~75% of physical VMEM (48 MiB on v7x, 96 MiB on v5e/v6e)."""
    try:
        cap = int(pltpu.get_tpu_info().vmem_capacity_bytes)
    except Exception:
        cap = 64 * 1024 * 1024  # conservative: assume v7x
    return int(min(cap * 3 // 4, cap - 16 * 1024 * 1024))


def _working_set_bytes(tm, tn, f_pad, x_it, w_it, o_it):
    """VMEM footprint of one grid step of the fused kernel (dtype-aware)."""
    bufs = (2 * tm * f_pad * x_it        # x row tile, double buffered
            + 2 * f_pad * tn * w_it      # weight column tile, double buffered
            + 2 * tm * tn * o_it)        # output tile, double buffered
    params = 2 * (2 * f_pad + tn) * 4    # gamma, beta, bias (f32, x2 buffers)
    scratch = tm * f_pad * w_it          # cached normalized tile y
    temps = 3 * tm * f_pad * 4 + 2 * tm * tn * 4  # f32 LN / epilogue live vals
    return bufs + params + scratch + temps


def _pick_tiles(rows, f_pad, x_it, w_it, o_it, budget, force_tn=None):
    """VMEM-aware (tm, tn).  Preference order:
       1) tn = f_pad  (resident weight: no LN recompute, weight read once)
       2) column-tiled: largest tm first (weight HBM bytes = (R/tm)*F*F),
          then the largest 256-aligned (else 128-aligned) tn that fits."""
    r8 = _round_up(max(rows, 1), 8)
    tm_cands = sorted({t for t in (min(r8, 1024), 512, 256, 128, 64, 32, 16, 8)
                       if t <= r8}, reverse=True)

    if force_tn is not None:
        for tm in tm_cands:
            if _working_set_bytes(tm, force_tn, f_pad, x_it, w_it, o_it) <= budget:
                return tm, force_tn
        return tm_cands[-1], force_tn

    # 1) resident weight
    for tm in tm_cands:
        if _working_set_bytes(tm, f_pad, f_pad, x_it, w_it, o_it) <= budget:
            return tm, f_pad

    # 2) column-tiled weight
    divs = [t for t in range(128, f_pad, 128) if f_pad % t == 0]
    tn_cands = sorted(divs, key=lambda t: (t % 256 != 0, -t)) or [128]
    for tm in tm_cands:
        for tn in tn_cands:
            if _working_set_bytes(tm, tn, f_pad, x_it, w_it, o_it) <= budget:
                return tm, tn
    return tm_cands[-1], 128


# -------------------------------------------------------------- LN helper
def _ln_block(x_ref, g_ref, b_ref, f_real, f_pad):
    """LayerNorm over the last dim of the (tm, f_pad) tile, exact even when
    the lane dim is zero-padded past f_real (biased variance, eps in rsqrt)."""
    x = x_ref[...].astype(jnp.float32)
    inv_f = 1.0 / float(f_real)
    mean = jnp.sum(x, axis=-1, keepdims=True) * inv_f
    centered = x - mean
    if f_pad != f_real:
        lane = lax.broadcasted_iota(jnp.int32, centered.shape, 1)
        centered = jnp.where(lane < f_real, centered, 0.0)
    var = jnp.sum(centered * centered, axis=-1, keepdims=True) * inv_f
    return centered * lax.rsqrt(var + LN_EPS) * g_ref[...] + b_ref[...]


# --------------------------------------- fused LN + Linear + residual kernels
def _fused_single_col_kernel(x_ref, g_ref, b_ref, w_ref, bias_ref, o_ref,
                             *, f_real, f_pad):
    # tn == f_pad: weight tile resident, LN computed exactly once per row tile.
    y = _ln_block(x_ref, g_ref, b_ref, f_real, f_pad)
    s = jnp.dot(y.astype(w_ref.dtype), w_ref[...],
                preferred_element_type=jnp.float32)
    # Residual re-read from VMEM in the epilogue (no full-tile f32 kept live).
    o_ref[...] = (x_ref[...].astype(jnp.float32) + s + bias_ref[...]
                  ).astype(o_ref.dtype)


def _fused_multi_col_kernel(x_ref, g_ref, b_ref, w_ref, bias_ref, o_ref, y_ref,
                            *, tn, f_real, f_pad):
    # LayerNorm only on the first column tile; cached in VMEM scratch y_ref
    # and reused for every j (x block index is (i, 0) so x is not re-fetched).
    @pl.when(pl.program_id(1) == 0)
    def _():
        y = _ln_block(x_ref, g_ref, b_ref, f_real, f_pad)
        y_ref[...] = y.astype(y_ref.dtype)

    s = jnp.dot(y_ref[...], w_ref[...], preferred_element_type=jnp.float32)
    col = pl.multiple_of(pl.program_id(1) * tn, tn)
    x_res = x_ref[:, pl.ds(col, tn)].astype(jnp.float32)
    o_ref[...] = (x_res + s + bias_ref[...]).astype(o_ref.dtype)


def fused_sublayer_connect_linear(x, gamma, beta, w, bias, force_tn=None):
    """x + (LayerNorm(x) @ w + bias), fused into a single pallas_call."""
    orig_shape = x.shape
    F = orig_shape[-1]
    assert w.shape == (F, F)
    x2d = x.reshape(-1, F)
    R = x2d.shape[0]

    f_pad = max(_round_up(F, 128), 128)   # lane-dense output (>=128, mult 128)
    x_it = x2d.dtype.itemsize
    w_it = w.dtype.itemsize
    o_it = x2d.dtype.itemsize
    budget = _vmem_budget_bytes()

    if force_tn is not None:
        assert force_tn % 128 == 0 and f_pad % force_tn == 0
    tm, tn = _pick_tiles(R, f_pad, x_it, w_it, o_it, budget, force_tn=force_tn)
    r_pad = _round_up(R, tm)
    grid = (r_pad // tm, f_pad // tn)

    # Zero padding keeps the math exact: padded gamma/beta/bias/weight entries
    # are zero, padded x lanes/rows are zero, and the in-kernel lane mask
    # removes padded lanes from the variance.  Padded rows/cols are sliced off.
    xp = (jnp.pad(x2d, ((0, r_pad - R), (0, f_pad - F)))
          if (r_pad != R or f_pad != F) else x2d)
    g2d = jnp.pad(gamma.reshape(1, F).astype(jnp.float32),
                  ((0, 0), (0, f_pad - F)))
    b2d = jnp.pad(beta.reshape(1, F).astype(jnp.float32),
                  ((0, 0), (0, f_pad - F)))
    bias2d = jnp.pad(bias.reshape(1, F).astype(jnp.float32),
                     ((0, 0), (0, f_pad - F)))
    w_p = jnp.pad(w, ((0, f_pad - F), (0, f_pad - F))) if f_pad != F else w

    if grid[1] == 1:
        # Resident weight, single column tile, no scratch, no LN recompute.
        kernel = functools.partial(_fused_single_col_kernel,
                                   f_real=F, f_pad=f_pad)
        out2d = pl.pallas_call(
            kernel,
            out_shape=jax.ShapeDtypeStruct((r_pad, f_pad), x.dtype),
            grid_spec=pltpu.PrefetchScalarGridSpec(
                num_scalar_prefetch=0,
                grid=(grid[0],),
                in_specs=[
                    pl.BlockSpec((tm, f_pad), lambda i: (i, 0)),   # x row tile
                    pl.BlockSpec((1, f_pad), lambda i: (0, 0)),    # gamma
                    pl.BlockSpec((1, f_pad), lambda i: (0, 0)),    # beta
                    pl.BlockSpec((f_pad, f_pad), lambda i: (0, 0)),  # weight
                    pl.BlockSpec((1, f_pad), lambda i: (0, 0)),    # bias
                ],
                out_specs=pl.BlockSpec((tm, f_pad), lambda i: (i, 0)),
            ),
            compiler_params=pltpu.CompilerParams(
                dimension_semantics=("parallel",),
                vmem_limit_bytes=budget,
            ),
        )(xp, g2d, b2d, w_p, bias2d)
    else:
        # Column-tiled weight; LN cached in VMEM scratch across the j axis
        # (j must be "arbitrary"; rows stay "parallel" for v7x megacore).
        kernel = functools.partial(_fused_multi_col_kernel,
                                   tn=tn, f_real=F, f_pad=f_pad)
        out2d = pl.pallas_call(
            kernel,
            out_shape=jax.ShapeDtypeStruct((r_pad, f_pad), x.dtype),
            grid_spec=pltpu.PrefetchScalarGridSpec(
                num_scalar_prefetch=0,
                grid=grid,
                in_specs=[
                    pl.BlockSpec((tm, f_pad), lambda i, j: (i, 0)),  # x row tile
                    pl.BlockSpec((1, f_pad), lambda i, j: (0, 0)),   # gamma
                    pl.BlockSpec((1, f_pad), lambda i, j: (0, 0)),   # beta
                    pl.BlockSpec((f_pad, tn), lambda i, j: (0, j)),  # weight col
                    pl.BlockSpec((1, tn), lambda i, j: (0, j)),      # bias col
                ],
                out_specs=pl.BlockSpec((tm, tn), lambda i, j: (i, j)),
                scratch_shapes=[pltpu.VMEM((tm, f_pad), w_p.dtype)],  # cached y
            ),
            compiler_params=pltpu.CompilerParams(
                dimension_semantics=("parallel", "arbitrary"),
                vmem_limit_bytes=budget,
            ),
        )(xp, g2d, b2d, w_p, bias2d)

    return out2d[:R, :F].reshape(orig_shape)


# ------------------------------------------------ general path (any sublayer)
def _layernorm_kernel(x_ref, g_ref, b_ref, o_ref, *, f_real, f_pad):
    o_ref[...] = _ln_block(x_ref, g_ref, b_ref, f_real, f_pad).astype(o_ref.dtype)


def layernorm_pallas(x, gamma, beta):
    orig_shape = x.shape
    F = orig_shape[-1]
    x2d = x.reshape(-1, F)
    R = x2d.shape[0]
    f_pad = max(_round_up(F, 128), 128)
    x_it = x2d.dtype.itemsize
    budget = _vmem_budget_bytes()

    r8 = _round_up(max(R, 1), 8)
    cands = sorted({t for t in (min(r8, 1024), 512, 256, 128, 64, 32, 16, 8)
                    if t <= r8}, reverse=True)
    tm = cands[-1]
    for t in cands:
        # 2x-buffered in/out tiles + f32 LN temporaries + params
        if (4 * t * f_pad * x_it + 3 * t * f_pad * 4 + 4 * f_pad * 4) <= budget:
            tm = t
            break
    r_pad = _round_up(R, tm)

    xp = (jnp.pad(x2d, ((0, r_pad - R), (0, f_pad - F)))
          if (r_pad != R or f_pad != F) else x2d)
    g2d = jnp.pad(gamma.reshape(1, F).astype(jnp.float32),
                  ((0, 0), (0, f_pad - F)))
    b2d = jnp.pad(beta.reshape(1, F).astype(jnp.float32),
                  ((0, 0), (0, f_pad - F)))

    kernel = functools.partial(_layernorm_kernel, f_real=F, f_pad=f_pad)
    out2d = pl.pallas_call(
        kernel,
        out_shape=jax.ShapeDtypeStruct((r_pad, f_pad), x.dtype),
        grid_spec=pltpu.PrefetchScalarGridSpec(
            num_scalar_prefetch=0,
            grid=(r_pad // tm,),
            in_specs=[
                pl.BlockSpec((tm, f_pad), lambda i: (i, 0)),
                pl.BlockSpec((1, f_pad), lambda i: (0, 0)),
                pl.BlockSpec((1, f_pad), lambda i: (0, 0)),
            ],
            out_specs=pl.BlockSpec((tm, f_pad), lambda i: (i, 0)),
        ),
        compiler_params=pltpu.CompilerParams(
            dimension_semantics=("parallel",),
            vmem_limit_bytes=budget,
        ),
    )(xp, g2d, b2d)
    return out2d[:R, :F].reshape(orig_shape)


def sublayer_connect(x, sublayer, gamma, beta):
    """General SubLayerConnect: arbitrary sublayer runs in plain JAX.

    Residual add is left to XLA (it fuses into the sublayer's last op).
    """
    # TODO(synk): arbitrary Python `sublayer` callables cannot be fused into
    # the Pallas kernel in general; only the Linear case uses the fused path.
    return x + sublayer(layernorm_pallas(x, gamma, beta))


# --------------------------------------------------------------------- main
if __name__ == "__main__":
    def ref_fn(x, gamma, beta, w, b):
        mean = jnp.mean(x, axis=-1, keepdims=True)
        var = jnp.mean((x - mean) ** 2, axis=-1, keepdims=True)
        normed = (x - mean) / jnp.sqrt(var + LN_EPS) * gamma + beta
        return x + (normed @ w + b)

    batch, seq, features = 2, 8, 32
    key = jax.random.PRNGKey(0)
    kx, kw, kb, kx2, kw2, kb2, kg2, kbt2 = jax.random.split(key, 8)

    x = jax.random.normal(kx, (batch, seq, features), dtype=jnp.float32)
    gamma = jnp.ones((features,), dtype=jnp.float32)   # torch default init
    beta = jnp.zeros((features,), dtype=jnp.float32)
    w = jax.random.normal(kw, (features, features), dtype=jnp.float32) * 0.02
    b = jax.random.normal(kb, (features,), dtype=jnp.float32) * 0.02

    # Fused single-kernel path (resident weight branch)
    out_fused = jax.block_until_ready(
        fused_sublayer_connect_linear(x, gamma, beta, w, b))
    # General path (arbitrary sublayer callable)
    out_general = jax.block_until_ready(
        sublayer_connect(x, lambda h: h @ w + b, gamma, beta))
    ref = ref_fn(x, gamma, beta, w, b)
    assert jnp.allclose(out_fused, ref, atol=1e-4, rtol=1e-5), (
        float(jnp.max(jnp.abs(out_fused - ref))))
    assert jnp.allclose(out_general, ref, atol=1e-4, rtol=1e-5), (
        float(jnp.max(jnp.abs(out_general - ref))))

    # Second small case exercising the column-tiled / cached-LN branch and the
    # ragged-F padding path: F=160 pads to 256 lanes, force_tn=128 -> 2 tiles.
    f2 = 160
    x2 = jax.random.normal(kx2, (batch, seq, f2), dtype=jnp.float32)
    gamma2 = 1.0 + 0.1 * jax.random.normal(kg2, (f2,), dtype=jnp.float32)
    beta2 = 0.1 * jax.random.normal(kbt2, (f2,), dtype=jnp.float32)
    w2 = jax.random.normal(kw2, (f2, f2), dtype=jnp.float32) * 0.02
    b2 = jax.random.normal(kb2, (f2,), dtype=jnp.float32) * 0.02
    out2 = jax.block_until_ready(
        fused_sublayer_connect_linear(x2, gamma2, beta2, w2, b2, force_tn=128))
    ref2 = ref_fn(x2, gamma2, beta2, w2, b2)
    assert jnp.allclose(out2, ref2, atol=1e-4, rtol=1e-5), (
        float(jnp.max(jnp.abs(out2 - ref2))))

    print("KERNEL_OK")
</pallas_src>

<mosaic_0001>
module attributes {stable_mosaic.version = 11 : i64} {
  func.func @_fused_single_col_kernel(%arg0: i32, %arg1: memref<16x128xf32, #tpu.memory_space<vmem>>, %arg2: memref<1x128xf32, #tpu.memory_space<vmem>>, %arg3: memref<1x128xf32, #tpu.memory_space<vmem>>, %arg4: memref<128x128xf32, #tpu.memory_space<vmem>>, %arg5: memref<1x128xf32, #tpu.memory_space<vmem>>, %arg6: memref<16x128xf32, #tpu.memory_space<vmem>>) attributes {dimension_semantics = [#tpu.dimension_semantics<parallel>], iteration_bounds = array<i64: 1>, scalar_prefetch = 0 : i64, scratch_operands = 0 : i64, tpu.core_type = #tpu.core_type<tc>, window_params = [{transform_indices = @transform_0, window_bounds = array<i64: 16, 128>}, {pipeline_mode = #tpu.pipeline_mode<synchronous>, transform_indices = @transform_1, window_bounds = array<i64: 1, 128>}, {pipeline_mode = #tpu.pipeline_mode<synchronous>, transform_indices = @transform_2, window_bounds = array<i64: 1, 128>}, {pipeline_mode = #tpu.pipeline_mode<synchronous>, transform_indices = @transform_3, window_bounds = array<i64: 128, 128>}, {pipeline_mode = #tpu.pipeline_mode<synchronous>, transform_indices = @transform_4, window_bounds = array<i64: 1, 128>}, {transform_indices = @transform_5, window_bounds = array<i64: 16, 128>}]} {
    %c0 = arith.constant 0 : index
    %c0_0 = arith.constant 0 : index
    %0 = vector.load %arg1[%c0, %c0_0] : memref<16x128xf32, #tpu.memory_space<vmem>>, vector<16x128xf32>
    %cst = arith.constant dense<0.000000e+00> : vector<16xf32>
    %1 = vector.multi_reduction <add>, %0, %cst [1] : vector<16x128xf32> to vector<16xf32>
    %2 = vector.shape_cast %1 : vector<16xf32> to vector<16x1xf32>
    %cst_1 = arith.constant 3.125000e-02 : f32
    %3 = vector.broadcast %cst_1 : f32 to vector<16x1xf32>
    %4 = arith.mulf %2, %3 : vector<16x1xf32>
    %5 = vector.broadcast %4 : vector<16x1xf32> to vector<16x128xf32>
    %6 = arith.subf %0, %5 : vector<16x128xf32>
    %7 = tpu.iota {dimensions = array<i32: 1>} : vector<16x128xi32>
    %c32_i32 = arith.constant 32 : i32
    %8 = vector.broadcast %c32_i32 : i32 to vector<16x128xi32>
    %9 = arith.cmpi slt, %7, %8 : vector<16x128xi32>
    %cst_2 = arith.constant 0.000000e+00 : f32
    %10 = vector.broadcast %cst_2 : f32 to vector<16x128xf32>
    %11 = arith.select %9, %6, %10 : vector<16x128xi1>, vector<16x128xf32>
    %12 = arith.mulf %11, %11 : vector<16x128xf32>
    %cst_3 = arith.constant dense<0.000000e+00> : vector<16xf32>
    %13 = vector.multi_reduction <add>, %12, %cst_3 [1] : vector<16x128xf32> to vector<16xf32>
    %14 = vector.shape_cast %13 : vector<16xf32> to vector<16x1xf32>
    %cst_4 = arith.constant 3.125000e-02 : f32
    %15 = vector.broadcast %cst_4 : f32 to vector<16x1xf32>
    %16 = arith.mulf %14, %15 : vector<16x1xf32>
    %cst_5 = arith.constant 9.99999974E-6 : f32
    %17 = vector.broadcast %cst_5 : f32 to vector<16x1xf32>
    %18 = arith.addf %16, %17 : vector<16x1xf32>
    %19 = math.rsqrt %18 : vector<16x1xf32>
    %20 = vector.broadcast %19 : vector<16x1xf32> to vector<16x128xf32>
    %21 = arith.mulf %11, %20 : vector<16x128xf32>
    %c0_6 = arith.constant 0 : index
    %c0_7 = arith.constant 0 : index
    %22 = vector.load %arg2[%c0_6, %c0_7] : memref<1x128xf32, #tpu.memory_space<vmem>>, vector<1x128xf32>
    %23 = vector.broadcast %22 : vector<1x128xf32> to vector<16x128xf32>
    %24 = arith.mulf %21, %23 : vector<16x128xf32>
    %c0_8 = arith.constant 0 : index
    %c0_9 = arith.constant 0 : index
    %25 = vector.load %arg3[%c0_8, %c0_9] : memref<1x128xf32, #tpu.memory_space<vmem>>, vector<1x128xf32>
    %26 = vector.broadcast %25 : vector<1x128xf32> to vector<16x128xf32>
    %27 = arith.addf %24, %26 : vector<16x128xf32>
    %c0_10 = arith.constant 0 : index
    %c0_11 = arith.constant 0 : index
    %28 = vector.load %arg4[%c0_10, %c0_11] : memref<128x128xf32, #tpu.memory_space<vmem>>, vector<128x128xf32>
    %cst_12 = arith.constant dense<0.000000e+00> : vector<16x128xf32>
    %29 = tpu.matmul %27, %28, %cst_12 {dimension_numbers = #tpu.dot_dimension_numbers<[1], [0], [0], [1], [0, 0, 1, 1], [], []>} : vector<16x128xf32>, vector<128x128xf32>, vector<16x128xf32> -> vector<16x128xf32>
    %c0_13 = arith.constant 0 : index
    %c0_14 = arith.constant 0 : index
    %30 = vector.load %arg1[%c0_13, %c0_14] : memref<16x128xf32, #tpu.memory_space<vmem>>, vector<16x128xf32>
    %31 = arith.addf %30, %29 : vector<16x128xf32>
    %c0_15 = arith.constant 0 : index
    %c0_16 = arith.constant 0 : index
    %32 = vector.load %arg5[%c0_15, %c0_16] : memref<1x128xf32, #tpu.memory_space<vmem>>, vector<1x128xf32>
    %33 = vector.broadcast %32 : vector<1x128xf32> to vector<16x128xf32>
    %34 = arith.addf %31, %33 : vector<16x128xf32>
    %c0_17 = arith.constant 0 : index
    %c0_18 = arith.constant 0 : index
    %35 = vector.load %arg6[%c0_17, %c0_18] : memref<16x128xf32, #tpu.memory_space<vmem>>, vector<16x128xf32>
    tpu.vector_store %arg6[%c0_17, %c0_18], %34 {strides = array<i32>} : memref<16x128xf32, #tpu.memory_space<vmem>>, vector<16x128xf32>,
    return
  }
  func.func @transform_0(%arg0: i32) -> (i32, i32) {
    %c0_i32 = arith.constant 0 : i32
    %c0_i32_0 = arith.constant 0 : i32
    return %arg0, %c0_i32 : i32, i32
  }
  func.func @transform_1(%arg0: i32) -> (i32, i32) {
    %c0_i32 = arith.constant 0 : i32
    %c0_i32_0 = arith.constant 0 : i32
    %c0_i32_1 = arith.constant 0 : i32
    return %c0_i32, %c0_i32_0 : i32, i32
  }
  func.func @transform_2(%arg0: i32) -> (i32, i32) {
    %c0_i32 = arith.constant 0 : i32
    %c0_i32_0 = arith.constant 0 : i32
    %c0_i32_1 = arith.constant 0 : i32
    return %c0_i32, %c0_i32_0 : i32, i32
  }
  func.func @transform_3(%arg0: i32) -> (i32, i32) {
    %c0_i32 = arith.constant 0 : i32
    %c0_i32_0 = arith.constant 0 : i32
    %c0_i32_1 = arith.constant 0 : i32
    return %c0_i32, %c0_i32_0 : i32, i32
  }
  func.func @transform_4(%arg0: i32) -> (i32, i32) {
    %c0_i32 = arith.constant 0 : i32
    %c0_i32_0 = arith.constant 0 : i32
    %c0_i32_1 = arith.constant 0 : i32
    return %c0_i32, %c0_i32_0 : i32, i32
  }
  func.func @transform_5(%arg0: i32) -> (i32, i32) {
    %c0_i32 = arith.constant 0 : i32
    %c0_i32_0 = arith.constant 0 : i32
    return %arg0, %c0_i32 : i32, i32
  }
}

</mosaic_0001>

<llo_original>
// kernel: tpu_custom_call.1
$region0: #{tpu_custom_call.1}
  #allocation0 [shape = 'u32[]', space=smem, size = 0x4, offset = 0x4, fixed_abs, tag = 'smem constant byte address 0x4 - core index']
  #allocation1 [shape = 'u32[144,128]{1,0:T(1,128)}', space=vmem, size = 0x12000, scoped, tag = 'internal scratch']
  %s0 = inlined_call_operand.hbm [shape: f32[16,128], index: 0, kind: input, shape index: {}]
  %s1 = inlined_call_operand.vmem [shape: f32[1,128], index: 1, kind: input, shape index: {}]
  %s2 = inlined_call_operand.vmem [shape: f32[1,128], index: 2, kind: input, shape index: {}]
  %s3 = inlined_call_operand.hbm [shape: f32[128,128], index: 3, kind: input, shape index: {}]
  %s4 = inlined_call_operand.vmem [shape: f32[1,128], index: 4, kind: input, shape index: {}]
  %s5 = inlined_call_operand.hbm [shape: f32[16,128], index: 5, kind: output, shape index: {}]
  %s6 = sld [smem:[#allocation0]]
  $region38: #{tpu_custom_call.1} parent=0
    _
  %s8 = ssub.s32 1, %s6
  %s9 = scalar_select 0, %s8, %s6
  $region1: #{tpu_custom_call.1} parent=0
    #allocation2 [shape = 'u8[8192]{0}', space=vmem, size = 0x2000, scoped, tag = 'input window, operand 0, single buffered']
    #allocation3 [shape = 's32[1]{0}', space=sflag, size = 0x4, scoped, tag = 'scoped memory for tpu_custom_call.1']
    #allocation4 [shape = 's32[1]{0}', space=sflag, size = 0x4, scoped, tag = 'scoped memory for tpu_custom_call.1']
    #allocation5 [shape = 'u8[65536]{0}', space=vmem, size = 0x10000, scoped, tag = 'input window, operand 3, single buffered']
    #allocation6 [shape = 's32[1]{0}', space=sflag, size = 0x4, scoped, tag = 'scoped memory for tpu_custom_call.1']
    #allocation7 [shape = 'u8[8192]{0}', space=vmem, size = 0x2000, scoped, tag = 'output window, operand 0, single buffered']
    %10 = vsyncpa [#allocation3], 0
    %11 = vsyncpa [#allocation6], 0
    %12 = vsyncpa [#allocation4], 0
    // Predicated region
    $region2: #{tpu_custom_call.1} parent=1 // pred_check
      _
    $region3: #{tpu_custom_call.1} parent=1 // pred_check_branch
      %14 = sbr.rel (0) target = $region5
    $region4: #{tpu_custom_call.1} parent=1 // pred_region
      %s16 = ssub.s32 256, 256
      %17 = vsyncadd [#allocation3], %s16
      %s18 = sshll.u32 [#allocation2], 4
      %s19 = int_to_ptr.vmem [resolvable:$true] %s18
      %24 = dma.hbm_to_vmem [thread:$0]  %s0, 256, %s19, [#allocation3], 128, 128, 8
    $region5: #{tpu_custom_call.1} parent=1 // pred_fallthru
      _
    // Predicated region
    $region6: #{tpu_custom_call.1} parent=1 // pred_check
      _
    $region7: #{tpu_custom_call.1} parent=1 // pred_check_branch
      %26 = sbr.rel (0) target = $region9
    $region8: #{tpu_custom_call.1} parent=1 // pred_region
      _
    $region9: #{tpu_custom_call.1} parent=1 // pred_fallthru
      _
    // Predicated region
    $region10: #{tpu_custom_call.1} parent=1 // pred_check
      _
    $region11: #{tpu_custom_call.1} parent=1 // pred_check_branch
      %28 = sbr.rel (0) target = $region13
    $region12: #{tpu_custom_call.1} parent=1 // pred_region
      _
    $region13: #{tpu_custom_call.1} parent=1 // pred_fallthru
      _
    // Predicated region
    $region14: #{tpu_custom_call.1} parent=1 // pred_check
      _
    $region15: #{tpu_custom_call.1} parent=1 // pred_check_branch
      %30 = sbr.rel (0) target = $region17
    $region16: #{tpu_custom_call.1} parent=1 // pred_region
      %s32 = ssub.s32 2048, 2048
      %33 = vsyncadd [#allocation6], %s32
      %s34 = sshll.u32 [#allocation5], 4
      %s35 = int_to_ptr.vmem [resolvable:$true] %s34
      %40 = dma.hbm_to_vmem [thread:$0]  %s3, 2048, %s35, [#allocation6], 128, 128, 8
    $region17: #{tpu_custom_call.1} parent=1 // pred_fallthru
      _
    // Predicated region
    $region18: #{tpu_custom_call.1} parent=1 // pred_check
      _
    $region19: #{tpu_custom_call.1} parent=1 // pred_check_branch
      %42 = sbr.rel (0) target = $region21
    $region20: #{tpu_custom_call.1} parent=1 // pred_region
      _
    $region21: #{tpu_custom_call.1} parent=1 // pred_fallthru
      _
    // Predicated region
    $region22: #{tpu_custom_call.1} parent=1 // pred_check
      _
    $region23: #{tpu_custom_call.1} parent=1 // pred_check_branch
      %44 = sbr.rel (0) target = $region25
    $region24: #{tpu_custom_call.1} parent=1 // pred_region
      %45 = dma.done [#allocation3], 256
    $region25: #{tpu_custom_call.1} parent=1 // pred_fallthru
      _
    // Predicated region
    $region26: #{tpu_custom_call.1} parent=1 // pred_check
      _
    $region27: #{tpu_custom_call.1} parent=1 // pred_check_branch
      %47 = sbr.rel (0) target = $region29
    $region28: #{tpu_custom_call.1} parent=1 // pred_region
      %48 = dma.done [#allocation6], 2048
    $region29: #{tpu_custom_call.1} parent=1 // pred_fallthru
      _
    %v49 = vld [vmem:[#allocation2] sm:$0xff]
    %v50 = vld [vmem:[#allocation2 + $0x8] sm:$0xff]
    %51 = vadd.xlane.f32.xlu0 %v49
    %v52 = vpop.xlane.xlu0 %51
    %53 = vadd.xlane.f32.xlu0 %v50
    %v54 = vpop.xlane.xlu0 %53
    %v55 = vmul.f32 %v52, 0.03125
    %v56 = vmul.f32 %v54, 0.03125
    %v57 = vsub.f32 %v49, %v55
    %v58 = vsub.f32 %v50, %v56
    %v59 = vlaneseq
    %v60 = vand.u32 %v59, 127
    %vm61 = vcmp.lt.s32.totalorder %v60, 32
    %v62 = vsel %vm61, %v57, 0.0
    %v63 = vsel %vm61, %v58, 0.0
    %v64 = vmul.f32 %v62, %v62
    %v65 = vmul.f32 %v63, %v63
    %66 = vadd.xlane.f32.xlu0 %v64
    %v67 = vpop.xlane.xlu0 %66
    %68 = vadd.xlane.f32.xlu0 %v65
    %v69 = vpop.xlane.xlu0 %68
    %v70 = vmul.f32 %v67, 0.03125
    %v71 = vmul.f32 %v69, 0.03125
    %v72 = vadd.f32 %v70, 1e-05
    %v73 = vadd.f32 %v71, 1e-05
    %v74 = vrsqrt.pop %v72
    %v75 = vrsqrt.pop %v73
    %v76 = vmul.f32 %v62, %v74
    %v77 = vmul.f32 %v63, %v75
    %v78 = vld [vmem:[%s1] sm:$0x1]
    %v80 = vlaneseq
    %v81 = vshrl.u32 %v80, 7
    %v82 = vsub.s32 0, %v81
    %v83 = vrot.slane %v78, %v82
    %v85 = vmul.f32 %v76, %v83
    %v86 = vmul.f32 %v77, %v83
    %v87 = vld [vmem:[%s2] sm:$0x1]
    %v89 = vlaneseq
    %v90 = vshrl.u32 %v89, 7
    %v91 = vsub.s32 0, %v90
    %v92 = vrot.slane %v87, %v91
    %v94 = vadd.f32 %v85, %v92
    %v95 = vadd.f32 %v86, %v92
    %v96 = vld [vmem:[#allocation5] sm:$0xff]
    %v97 = vld [vmem:[#allocation5 + $0x8] sm:$0xff]
    %v98 = vld [vmem:[#allocation5 + $0x10] sm:$0xff]
    %v99 = vld [vmem:[#allocation5 + $0x18] sm:$0xff]
    %v100 = vld [vmem:[#allocation5 + $0x20] sm:$0xff]
    %v101 = vld [vmem:[#allocation5 + $0x28] sm:$0xff]
    %v102 = vld [vmem:[#allocation5 + $0x30] sm:$0xff]
    %v103 = vld [vmem:[#allocation5 + $0x38] sm:$0xff]
    %v104 = vld [vmem:[#allocation5 + $0x40] sm:$0xff]
    %v105 = vld [vmem:[#allocation5 + $0x48] sm:$0xff]
    %v106 = vld [vmem:[#allocation5 + $0x50] sm:$0xff]
    %v107 = vld [vmem:[#allocation5 + $0x58] sm:$0xff]
    %v108 = vld [vmem:[#allocation5 + $0x60] sm:$0xff]
    %v109 = vld [vmem:[#allocation5 + $0x68] sm:$0xff]
    %v110 = vld [vmem:[#allocation5 + $0x70] sm:$0xff]
    %v111 = vld [vmem:[#allocation5 + $0x78] sm:$0xff]
    %112 = vmatprep.subr.mxu0 0.0
    %113 = vmatpush1.msra.mxu0 %v96
    %114 = vmatprep.subr.mxu0 0.0
    %115 = vmatpush1.msra.mxu0 %v97
    %116 = vmatprep.subr.mxu0 0.0
    %117 = vmatpush1.msra.mxu0 %v98
    %118 = vmatprep.subr.mxu0 0.0
    %119 = vmatpush1.msra.mxu0 %v99
    %120 = vmatprep.subr.mxu0 0.0
    %121 = vmatpush1.msra.mxu0 %v100
    %122 = vmatprep.subr.mxu0 0.0
    %123 = vmatpush1.msra.mxu0 %v101
    %124 = vmatprep.subr.mxu0 0.0
    %125 = vmatpush1.msra.mxu0 %v102
    %126 = vmatprep.subr.mxu0 0.0
    %127 = vmatpush1.msra.mxu0 %v103
    %128 = vmatprep.subr.mxu0 0.0
    %129 = vmatpush1.msra.mxu0 %v104
    %130 = vmatprep.subr.mxu0 0.0
    %131 = vmatpush1.msra.mxu0 %v105
    %132 = vmatprep.subr.mxu0 0.0
    %133 = vmatpush1.msra.mxu0 %v106
    %134 = vmatprep.subr.mxu0 0.0
    %135 = vmatpush1.msra.mxu0 %v107
    %136 = vmatprep.subr.mxu0 0.0
    %137 = vmatpush1.msra.mxu0 %v108
    %138 = vmatprep.subr.mxu0 0.0
    %139 = vmatpush1.msra.mxu0 %v109
    %140 = vmatprep.subr.mxu0 0.0
    %141 = vmatpush1.msra.mxu0 %v110
    %142 = vmatprep.subr.mxu0 0.0
    %143 = vmatpush1.msra.mxu0 %v111
    %144 = vmatprep.subr.mxu0 0.0
    %145 = vmatpush1.msra.mxu0 0.0
    %146 = vmatprep.subr.mxu0 0.0
    %147 = vmatpush1.msra.mxu0 0.0
    %148 = vmatprep.subr.mxu0 0.0
    %149 = vmatpush1.msra.mxu0 0.0
    %150 = vmatprep.subr.mxu0 0.0
    %151 = vmatpush1.msra.mxu0 0.0
    %152 = vmatprep.subr.mxu0 0.0
    %153 = vmatpush1.msra.mxu0 0.0
    %154 = vmatprep.subr.mxu0 0.0
    %155 = vmatpush1.msra.mxu0 0.0
    %156 = vmatprep.subr.mxu0 0.0
    %157 = vmatpush1.msra.mxu0 0.0
    %158 = vmatprep.subr.mxu0 0.0
    %159 = vmatpush1.msra.mxu0 0.0
    %160 = vmatprep.subr.mxu0 0.0
    %161 = vmatpush1.msra.mxu0 0.0
    %162 = vmatprep.subr.mxu0 0.0
    %163 = vmatpush1.msra.mxu0 0.0
    %164 = vmatprep.subr.mxu0 0.0
    %165 = vmatpush1.msra.mxu0 0.0
    %166 = vmatprep.subr.mxu0 0.0
    %167 = vmatpush1.msra.mxu0 0.0
    %168 = vmatprep.subr.mxu0 0.0
    %169 = vmatpush1.msra.mxu0 0.0
    %170 = vmatprep.subr.mxu0 0.0
    %171 = vmatpush1.msra.mxu0 0.0
    %172 = vmatprep.subr.mxu0 0.0
    %173 = vmatpush1.msra.mxu0 0.0
    %174 = vmatprep.subr.mxu0 0.0
    %175 = vmatpush1.msra.mxu0 0.0
    %176 = vmatprep.mubr.f32.mxu0 0.0
    %177 = vmatmul.mubr.f32.gmra.mrb[0].mxu0 %v94
    %v178 = vpop.f32.mrb[0].mxu0
    %v179 = vadd.f32 0.0, %v178
    %v180 = vpop.f32.mrb[0].mxu0
    %181 = vmatprep.mubr.f32.mxu0 0.0
    %182 = vmatmul.mubr.f32.gmra.mrb[0].mxu0 %v95
    %v183 = vpop.f32.mrb[0].mxu0
    %v184 = vadd.f32 0.0, %v183
    %v185 = vpop.f32.mrb[0].mxu0
    %186 = vdwg.mxu0
    %v187 = vadd.f32 %v49, %v179
    %v188 = vadd.f32 %v50, %v184
    %v189 = vld [vmem:[%s4] sm:$0x1]
    %v191 = vlaneseq
    %v192 = vshrl.u32 %v191, 7
    %v193 = vsub.s32 0, %v192
    %v194 = vrot.slane %v189, %v193
    %v196 = vadd.f32 %v187, %v194
    %v197 = vadd.f32 %v188, %v194
    %198 = vst [vmem:[#allocation7] sm:$0xff] %v196
    %199 = vst [vmem:[#allocation7 + $0x8] sm:$0xff] %v197
    // Predicated region
    $region30: #{tpu_custom_call.1} parent=1 // pred_check
      _
    $region31: #{tpu_custom_call.1} parent=1 // pred_check_branch
      %201 = sbr.rel (0) target = $region33
    $region32: #{tpu_custom_call.1} parent=1 // pred_region
      %s203 = ssub.s32 256, 256
      %204 = vsyncadd [#allocation4], %s203
      %s205 = sshll.u32 [#allocation7], 4
      %s206 = int_to_ptr.vmem [resolvable:$true] %s205
      %211 = dma.vmem_to_hbm [thread:$0]  %s206, 256, %s5, [#allocation4], 128, 128, 8
    $region33: #{tpu_custom_call.1} parent=1 // pred_fallthru
      _
    // Predicated region
    $region34: #{tpu_custom_call.1} parent=1 // pred_check
      _
    $region35: #{tpu_custom_call.1} parent=1 // pred_check_branch
      %213 = sbr.rel (0) target = $region37
    $region36: #{tpu_custom_call.1} parent=1 // pred_region
      %214 = dma.done [#allocation4], 256
    $region37: #{tpu_custom_call.1} parent=1 // pred_fallthru
      _
    %215 = vsyncpa [#allocation3], 1
    %216 = vsyncpa [#allocation6], 1
    %217 = vsyncpa [#allocation4], 1

</llo_original>
